<compile_context>
chip_gen: v6e
topology: v6e:2x2x1
jax: 0.10.0
libtpu: 0.0.40
codegen_flags: <defaults>
</compile_context>

<pallas_src>
import functools

import jax
import jax.numpy as jnp
from jax.experimental import pallas as pl
from jax.experimental.pallas import tpu as pltpu


def _per_pixel_focal_loss(x_ref, lab_ref, *, n_classes, gamma):
    """Per-pixel focal NLL loss for the current tile.

    x_ref:   (1, C, t_rows, 128) logits tile (float)
    lab_ref: (1, t_rows, 128)    int32 labels tile
    returns: (t_rows, 128)       float32 per-pixel loss
    """
    lab = lab_ref[0]                                        # (t_rows, 128) int32

    # Pass 1: running max over channels (numerical stability).
    m = x_ref[0, 0].astype(jnp.float32)
    for c in range(1, n_classes):
        m = jnp.maximum(m, x_ref[0, c].astype(jnp.float32))

    # Pass 2 (fused): softmax denominator + gather of the label channel.
    denom = jnp.zeros_like(m)
    xs_lab = jnp.zeros_like(m)
    for c in range(n_classes):
        xc = x_ref[0, c].astype(jnp.float32) - m
        denom = denom + jnp.exp(xc)
        xs_lab = jnp.where(lab == c, xc, xs_lab)

    log_sm_lab = xs_lab - jnp.log(denom)                    # log_softmax[label]
    sm_lab = jnp.exp(log_sm_lab)                            # softmax[label]
    fac = 1.0 - sm_lab

    if float(gamma) == float(int(gamma)) and gamma >= 0:
        gi = int(gamma)
        if gi == 0:
            factor = jnp.ones_like(fac)
        else:
            factor = fac
            for _ in range(gi - 1):
                factor = factor * fac                       # gamma=2 -> fac*fac
    else:
        factor = fac ** jnp.float32(gamma)                  # non-integer fallback

    return -(factor * log_sm_lab)                           # (t_rows, 128)


def _focal_map_kernel(x_ref, lab_ref, out_ref, *, n_classes, gamma):
    out_ref[0] = _per_pixel_focal_loss(x_ref, lab_ref,
                                       n_classes=n_classes, gamma=gamma)


def _focal_sum_kernel(x_ref, lab_ref, out_ref, *, n_classes, gamma,
                      t_rows, n_pixels, mask_tail):
    loss = _per_pixel_focal_loss(x_ref, lab_ref,
                                 n_classes=n_classes, gamma=gamma)
    if mask_tail:
        # Zero out lanes/rows past the real pixel count (ragged last block
        # and/or 128-lane pad).  select() blocks any NaN from OOB garbage.
        r = pl.program_id(1)
        row = jax.lax.broadcasted_iota(jnp.int32, loss.shape, 0)
        lane = jax.lax.broadcasted_iota(jnp.int32, loss.shape, 1)
        pix = (r * t_rows + row) * 128 + lane
        loss = jnp.where(pix < n_pixels, loss, 0.0)
    # Per-lane partial sum for this tile: (1, 128), final tiny sum in XLA.
    out_ref[0, 0] = jnp.sum(loss, axis=0, keepdims=True)


def softmax_focal_loss(logits, labels, gamma=2, reduce=True, *,
                       block_bytes=2 * 1024 * 1024):
    """logits: (N, C, H, W) float; labels: (N, H, W) int."""
    # TODO(synk): NLLLoss's default ignore_index=-100 is not handled; labels
    #             are assumed to be valid class indices in [0, C).
    N, C, H, W = logits.shape
    P = H * W
    lanes = 128

    # Free row-major reshapes put pixels on (sublane, lane).  A small pad copy
    # is only paid when P is not a multiple of 128; ragged *row blocks* are
    # handled by the grid (no pad to a tile multiple).
    R = pl.cdiv(P, lanes)
    P_pad = R * lanes
    x = logits.reshape(N, C, P)
    lab = labels.reshape(N, P).astype(jnp.int32)
    if P_pad != P:
        x = jnp.pad(x, ((0, 0), (0, 0), (0, P_pad - P)))
        lab = jnp.pad(lab, ((0, 0), (0, P_pad - P)))
    x = x.reshape(N, C, R, lanes)
    lab = lab.reshape(N, R, lanes)

    # Byte-budgeted row tile: logits block ~= block_bytes regardless of C.
    itemsize = jnp.dtype(logits.dtype).itemsize
    bytes_per_row = C * lanes * itemsize
    t_rows = max(8, (block_bytes // bytes_per_row) // 8 * 8)
    if t_rows >= R:
        t_rows = R                       # single row-block per image
    NB = pl.cdiv(R, t_rows)
    grid = (N, NB)

    in_specs = [
        pl.BlockSpec((1, C, t_rows, lanes), lambda n, r: (n, 0, r, 0)),
        pl.BlockSpec((1, t_rows, lanes), lambda n, r: (n, r, 0)),
    ]
    cparams = pltpu.CompilerParams(
        dimension_semantics=("parallel", "parallel"),
        vmem_limit_bytes=32 * 1024 * 1024,
    )

    if reduce:
        kernel = functools.partial(
            _focal_sum_kernel, n_classes=C, gamma=gamma, t_rows=t_rows,
            n_pixels=P, mask_tail=(NB * t_rows * lanes != P))
        partials = pl.pallas_call(
            kernel,
            out_shape=jax.ShapeDtypeStruct((N, NB, 1, lanes), jnp.float32),
            grid_spec=pltpu.PrefetchScalarGridSpec(
                num_scalar_prefetch=0,
                grid=grid,
                in_specs=in_specs,
                out_specs=pl.BlockSpec((1, 1, 1, lanes),
                                       lambda n, r: (n, r, 0, 0)),
            ),
            compiler_params=cparams,
        )(x, lab)
        return jnp.sum(partials) / (N * P)        # mean over N*H*W

    kernel = functools.partial(_focal_map_kernel, n_classes=C, gamma=gamma)
    per_pix = pl.pallas_call(
        kernel,
        out_shape=jax.ShapeDtypeStruct((N, R, lanes), jnp.float32),
        grid_spec=pltpu.PrefetchScalarGridSpec(
            num_scalar_prefetch=0,
            grid=grid,
            in_specs=in_specs,
            out_specs=pl.BlockSpec((1, t_rows, lanes), lambda n, r: (n, r, 0)),
        ),
        compiler_params=cparams,
    )(x, lab)
    return per_pix.reshape(N, P_pad)[:, :P].reshape(N, H, W)


def _reference(logits, labels, gamma=2, reduce=True):
    # pure-JAX reference of the PyTorch forward
    log_sm = jax.nn.log_softmax(logits, axis=1)
    sm = jax.nn.softmax(logits, axis=1)
    log_score = ((1.0 - sm) ** gamma) * log_sm
    gathered = jnp.take_along_axis(log_score, labels[:, None, :, :], axis=1)[:, 0]
    loss = -gathered
    return jnp.mean(loss) if reduce else loss


if __name__ == "__main__":
    key = jax.random.PRNGKey(0)
    k1, k2 = jax.random.split(key)
    N, C, H, W = 2, 4, 16, 16
    logits = jax.random.normal(k1, (N, C, H, W), dtype=jnp.float32)
    labels = jax.random.randint(k2, (N, H, W), 0, C, dtype=jnp.int32)

    loss = softmax_focal_loss(logits, labels, gamma=2, reduce=True)
    jax.block_until_ready(loss)
    loss_ne = softmax_focal_loss(logits, labels, gamma=2, reduce=False)
    jax.block_until_ready(loss_ne)

    ref = _reference(logits, labels, gamma=2, reduce=True)
    ref_ne = _reference(logits, labels, gamma=2, reduce=False)
    assert jnp.allclose(loss, ref, atol=1e-5, rtol=1e-5)
    assert jnp.allclose(loss_ne, ref_ne, atol=1e-5, rtol=1e-5)

    # Ragged spatial size (P not a multiple of 128) exercises the mask path.
    H2, W2 = 10, 12
    logits2 = jax.random.normal(k1, (N, C, H2, W2), dtype=jnp.float32)
    labels2 = jax.random.randint(k2, (N, H2, W2), 0, C, dtype=jnp.int32)
    loss2 = softmax_focal_loss(logits2, labels2, gamma=2, reduce=True)
    jax.block_until_ready(loss2)
    assert jnp.allclose(loss2, _reference(logits2, labels2, 2, True),
                        atol=1e-5, rtol=1e-5)

    print("KERNEL_OK")
</pallas_src>

<mosaic_0001>
module attributes {stable_mosaic.version = 11 : i64} {
  func.func @_focal_sum_kernel(%arg0: i32, %arg1: i32, %arg2: memref<1x4x2x128xf32, #tpu.memory_space<vmem>>, %arg3: memref<1x2x128xi32, #tpu.memory_space<vmem>>, %arg4: memref<1x1x1x128xf32, #tpu.memory_space<vmem>>) attributes {dimension_semantics = [#tpu.dimension_semantics<parallel>, #tpu.dimension_semantics<parallel>], iteration_bounds = array<i64: 2, 1>, scalar_prefetch = 0 : i64, scratch_operands = 0 : i64, tpu.core_type = #tpu.core_type<tc>, window_params = [{transform_indices = @transform_0, window_bounds = array<i64: 1, 4, 2, 128>}, {transform_indices = @transform_1, window_bounds = array<i64: 1, 2, 128>}, {transform_indices = @transform_2, window_bounds = array<i64: 1, 1, 1, 128>}]} {
    %c0 = arith.constant 0 : index
    %c0_0 = arith.constant 0 : index
    %c0_1 = arith.constant 0 : index
    %0 = vector.load %arg3[%c0, %c0_0, %c0_1] : memref<1x2x128xi32, #tpu.memory_space<vmem>>, vector<1x2x128xi32>
    %1 = vector.shape_cast %0 : vector<1x2x128xi32> to vector<2x128xi32>
    %c0_2 = arith.constant 0 : index
    %c0_3 = arith.constant 0 : index
    %c0_4 = arith.constant 0 : index
    %c0_5 = arith.constant 0 : index
    %2 = vector.load %arg2[%c0_2, %c0_3, %c0_4, %c0_5] : memref<1x4x2x128xf32, #tpu.memory_space<vmem>>, vector<1x1x2x128xf32>
    %3 = vector.shape_cast %2 : vector<1x1x2x128xf32> to vector<2x128xf32>
    %c0_6 = arith.constant 0 : index
    %c1 = arith.constant 1 : index
    %c0_7 = arith.constant 0 : index
    %c0_8 = arith.constant 0 : index
    %4 = vector.load %arg2[%c0_6, %c1, %c0_7, %c0_8] : memref<1x4x2x128xf32, #tpu.memory_space<vmem>>, vector<1x1x2x128xf32>
    %5 = vector.shape_cast %4 : vector<1x1x2x128xf32> to vector<2x128xf32>
    %6 = arith.maximumf %3, %5 : vector<2x128xf32>
    %c0_9 = arith.constant 0 : index
    %c2 = arith.constant 2 : index
    %c0_10 = arith.constant 0 : index
    %c0_11 = arith.constant 0 : index
    %7 = vector.load %arg2[%c0_9, %c2, %c0_10, %c0_11] : memref<1x4x2x128xf32, #tpu.memory_space<vmem>>, vector<1x1x2x128xf32>
    %8 = vector.shape_cast %7 : vector<1x1x2x128xf32> to vector<2x128xf32>
    %9 = arith.maximumf %6, %8 : vector<2x128xf32>
    %c0_12 = arith.constant 0 : index
    %c3 = arith.constant 3 : index
    %c0_13 = arith.constant 0 : index
    %c0_14 = arith.constant 0 : index
    %10 = vector.load %arg2[%c0_12, %c3, %c0_13, %c0_14] : memref<1x4x2x128xf32, #tpu.memory_space<vmem>>, vector<1x1x2x128xf32>
    %11 = vector.shape_cast %10 : vector<1x1x2x128xf32> to vector<2x128xf32>
    %12 = arith.maximumf %9, %11 : vector<2x128xf32>
    %cst = arith.constant 0.000000e+00 : f32
    %13 = vector.broadcast %cst : f32 to vector<2x128xf32>
    %cst_15 = arith.constant 0.000000e+00 : f32
    %14 = vector.broadcast %cst_15 : f32 to vector<2x128xf32>
    %c0_16 = arith.constant 0 : index
    %c0_17 = arith.constant 0 : index
    %c0_18 = arith.constant 0 : index
    %c0_19 = arith.constant 0 : index
    %15 = vector.load %arg2[%c0_16, %c0_17, %c0_18, %c0_19] : memref<1x4x2x128xf32, #tpu.memory_space<vmem>>, vector<1x1x2x128xf32>
    %16 = vector.shape_cast %15 : vector<1x1x2x128xf32> to vector<2x128xf32>
    %17 = arith.subf %16, %12 : vector<2x128xf32>
    %18 = math.exp %17 : vector<2x128xf32>
    %19 = arith.addf %13, %18 : vector<2x128xf32>
    %c0_i32 = arith.constant 0 : i32
    %20 = vector.broadcast %c0_i32 : i32 to vector<2x128xi32>
    %21 = arith.cmpi eq, %1, %20 : vector<2x128xi32>
    %22 = arith.select %21, %17, %14 : vector<2x128xi1>, vector<2x128xf32>
    %c0_20 = arith.constant 0 : index
    %c1_21 = arith.constant 1 : index
    %c0_22 = arith.constant 0 : index
    %c0_23 = arith.constant 0 : index
    %23 = vector.load %arg2[%c0_20, %c1_21, %c0_22, %c0_23] : memref<1x4x2x128xf32, #tpu.memory_space<vmem>>, vector<1x1x2x128xf32>
    %24 = vector.shape_cast %23 : vector<1x1x2x128xf32> to vector<2x128xf32>
    %25 = arith.subf %24, %12 : vector<2x128xf32>
    %26 = math.exp %25 : vector<2x128xf32>
    %27 = arith.addf %19, %26 : vector<2x128xf32>
    %c1_i32 = arith.constant 1 : i32
    %28 = vector.broadcast %c1_i32 : i32 to vector<2x128xi32>
    %29 = arith.cmpi eq, %1, %28 : vector<2x128xi32>
    %30 = arith.select %29, %25, %22 : vector<2x128xi1>, vector<2x128xf32>
    %c0_24 = arith.constant 0 : index
    %c2_25 = arith.constant 2 : index
    %c0_26 = arith.constant 0 : index
    %c0_27 = arith.constant 0 : index
    %31 = vector.load %arg2[%c0_24, %c2_25, %c0_26, %c0_27] : memref<1x4x2x128xf32, #tpu.memory_space<vmem>>, vector<1x1x2x128xf32>
    %32 = vector.shape_cast %31 : vector<1x1x2x128xf32> to vector<2x128xf32>
    %33 = arith.subf %32, %12 : vector<2x128xf32>
    %34 = math.exp %33 : vector<2x128xf32>
    %35 = arith.addf %27, %34 : vector<2x128xf32>
    %c2_i32 = arith.constant 2 : i32
    %36 = vector.broadcast %c2_i32 : i32 to vector<2x128xi32>
    %37 = arith.cmpi eq, %1, %36 : vector<2x128xi32>
    %38 = arith.select %37, %33, %30 : vector<2x128xi1>, vector<2x128xf32>
    %c0_28 = arith.constant 0 : index
    %c3_29 = arith.constant 3 : index
    %c0_30 = arith.constant 0 : index
    %c0_31 = arith.constant 0 : index
    %39 = vector.load %arg2[%c0_28, %c3_29, %c0_30, %c0_31] : memref<1x4x2x128xf32, #tpu.memory_space<vmem>>, vector<1x1x2x128xf32>
    %40 = vector.shape_cast %39 : vector<1x1x2x128xf32> to vector<2x128xf32>
    %41 = arith.subf %40, %12 : vector<2x128xf32>
    %42 = math.exp %41 : vector<2x128xf32>
    %43 = arith.addf %35, %42 : vector<2x128xf32>
    %c3_i32 = arith.constant 3 : i32
    %44 = vector.broadcast %c3_i32 : i32 to vector<2x128xi32>
    %45 = arith.cmpi eq, %1, %44 : vector<2x128xi32>
    %46 = arith.select %45, %41, %38 : vector<2x128xi1>, vector<2x128xf32>
    %47 = math.log %43 : vector<2x128xf32>
    %48 = arith.subf %46, %47 : vector<2x128xf32>
    %49 = math.exp %48 : vector<2x128xf32>
    %cst_32 = arith.constant 1.000000e+00 : f32
    %50 = vector.broadcast %cst_32 : f32 to vector<2x128xf32>
    %51 = arith.subf %50, %49 : vector<2x128xf32>
    %52 = arith.mulf %51, %51 : vector<2x128xf32>
    %53 = arith.mulf %52, %48 : vector<2x128xf32>
    %cst_33 = arith.constant 0.000000e+00 : f32
    %54 = vector.broadcast %cst_33 : f32 to vector<2x128xf32>
    %55 = arith.subf %54, %53 : vector<2x128xf32>
    %cst_34 = arith.constant dense<0.000000e+00> : vector<128xf32>
    %56 = vector.multi_reduction <add>, %55, %cst_34 [0] : vector<2x128xf32> to vector<128xf32>
    %57 = vector.shape_cast %56 : vector<128xf32> to vector<1x128xf32>
    %c0_35 = arith.constant 0 : index
    %c0_36 = arith.constant 0 : index
    %c0_37 = arith.constant 0 : index
    %c0_38 = arith.constant 0 : index
    %58 = vector.load %arg4[%c0_35, %c0_36, %c0_37, %c0_38] : memref<1x1x1x128xf32, #tpu.memory_space<vmem>>, vector<1x1x1x128xf32>
    %59 = vector.shape_cast %58 : vector<1x1x1x128xf32> to vector<1x128xf32>
    %60 = vector.shape_cast %57 : vector<1x128xf32> to vector<1x1x1x128xf32>
    tpu.vector_store %arg4[%c0_35, %c0_36, %c0_37, %c0_38], %60 {strides = array<i32>} : memref<1x1x1x128xf32, #tpu.memory_space<vmem>>, vector<1x1x1x128xf32>,
    return
  }
  func.func @transform_0(%arg0: i32, %arg1: i32) -> (i32, i32, i32, i32) {
    %c0_i32 = arith.constant 0 : i32
    %c0_i32_0 = arith.constant 0 : i32
    %c0_i32_1 = arith.constant 0 : i32
    return %arg0, %c0_i32, %arg1, %c0_i32_0 : i32, i32, i32, i32
  }
  func.func @transform_1(%arg0: i32, %arg1: i32) -> (i32, i32, i32) {
    %c0_i32 = arith.constant 0 : i32
    %c0_i32_0 = arith.constant 0 : i32
    return %arg0, %arg1, %c0_i32 : i32, i32, i32
  }
  func.func @transform_2(%arg0: i32, %arg1: i32) -> (i32, i32, i32, i32) {
    %c0_i32 = arith.constant 0 : i32
    %c0_i32_0 = arith.constant 0 : i32
    %c0_i32_1 = arith.constant 0 : i32
    return %arg0, %arg1, %c0_i32, %c0_i32_0 : i32, i32, i32, i32
  }
}

</mosaic_0001>

<llo_original>
// kernel: tpu_custom_call.1
$region0: #{tpu_custom_call.1}
  #allocation0 [shape = 'u32[]', space=smem, size = 0x4, offset = 0x4, fixed_abs, tag = 'smem constant byte address 0x4 - core index']
  #allocation1 [shape = 'u32[144,128]{1,0:T(1,128)}', space=vmem, size = 0x12000, scoped, tag = 'internal scratch']
  %s0 = inlined_call_operand.hbm [shape: f32[2,4,2,128], index: 0, kind: input, shape index: {}]
  %s1 = inlined_call_operand.hbm [shape: s32[2,2,128], index: 1, kind: input, shape index: {}]
  %s2 = inlined_call_operand.hbm [shape: f32[2,1,1,128], index: 2, kind: output, shape index: {}]
  %s3 = sld [smem:[#allocation0]]
  $region49: #{tpu_custom_call.1} parent=0
    _
  %s5 = ssub.s32 1, %s3
  %s6 = scalar_select 0, %s5, %s3
  $region1: #{tpu_custom_call.1} parent=0
    #allocation2 [shape = 'u8[8192]{0}', space=vmem, size = 0x2000, scoped, tag = 'input window, operand 0']
    #allocation3 [shape = 's32[2]{0}', space=sflag, size = 0x8, scoped, tag = 'scoped memory for tpu_custom_call.1']
    #allocation4 [shape = 's32[2]{0}', space=sflag, size = 0x8, scoped, tag = 'scoped memory for tpu_custom_call.1']
    #allocation5 [shape = 'u8[2048]{0}', space=vmem, size = 0x800, scoped, tag = 'input window, operand 1']
    #allocation6 [shape = 's32[2]{0}', space=sflag, size = 0x8, scoped, tag = 'scoped memory for tpu_custom_call.1']
    #allocation7 [shape = 'u8[1024]{0}', space=vmem, size = 0x400, scoped, tag = 'output window, operand 0']
    %7 = vsyncpa [#allocation3], 0
    %s8 = scalar_lea.sflag [#allocation3], 1
    %9 = vsyncpa %s8, 0
    %10 = vsyncpa [#allocation6], 0
    %s11 = scalar_lea.sflag [#allocation6], 1
    %12 = vsyncpa %s11, 0
    %13 = vsyncpa [#allocation4], 0
    %s14 = scalar_lea.sflag [#allocation4], 1
    %15 = vsyncpa %s14, 0
    loop: start=0, step=1, limit=4
    $region2: #{tpu_custom_call.1} parent=1 // loop_pre_header
      _
    $region3: #{tpu_custom_call.1} parent=1 // loop_header
      %s17 = sphi 0, %s21
      %p18 = scmp.ge.s32.totalorder %s17, 4
      %s24 = sphi 0, %s36
      %s25 = sphi 0, %s32
      %s26 = sphi 0, %s24
      %s27 = sphi 0, %s25
      %s28 = sphi 0, %s26
      %s29 = sphi 0, %s27
      %s41 = sphi 0, %s43
      %s44 = sphi 0, %s41
      %s45 = sphi 0, %s44
      %s61 = sphi 0, %s45
      %s69 = sphi 0, %s71
      %s72 = sphi 0, %s69
      %s73 = sphi 0, %s72
      %s89 = sphi 0, %s73
      %s97 = sphi 0, %s99
      %s100 = sphi 0, %s97
      %s101 = sphi 0, %s100
      %s117 = sphi 0, %s101
    $region4: #{tpu_custom_call.1} parent=1 // loop_header_branch
      %20 = sbr.rel (%p18) target = $region8
    $region5: #{tpu_custom_call.1} parent=1 // loop_body
      %s22 = ssub.s32 %s17, 1
      %s23 = ssub.s32 %s17, 2
      %s30 = sadd.s32 1, %s25
      %p31 = scmp.ge.s32.totalorder %s30, 1
      %s32 = scalar_select %p31, 0, %s30
      %s33 = sadd.s32 1, %s24
      %s34 = scalar_select %p31, %s33, %s24
      %p35 = scmp.ge.s32.totalorder %s34, 2
      %s36 = scalar_select %p35, 0, %s34
      %s37 = ssub.s32 %s24, %s36
      %s38 = ssub.s32 %s25, %s32
      %s39 = sor.u32 %s37, %s38
      %p40 = scmp.eq.s32.totalorder %s39, 0
      %s42 = sadd.s32 %s41, 1
      %s43 = scalar_select %p40, %s41, %s42
      %p46 = pneg %p40
      %p47 = scmp.eq.s32.totalorder %s17, 1
      %p48 = por %p46, %p47
      %p49 = scmp.ne.s32.totalorder %s41, %s44
      %p50 = scmp.eq.s32.totalorder %s17, 0
      %p51 = por %p49, %p50
      %p52 = scmp.ne.s32.totalorder %s41, %s44
      %p53 = scmp.eq.s32.totalorder %s22, 1
      %p54 = por %p52, %p53
      %p55 = scmp.ne.s32.totalorder %s44, %s45
      %p56 = scmp.eq.s32.totalorder %s22, 0
      %p57 = por %p55, %p56
      %p58 = scmp.ne.s32.totalorder %s44, %s45
      %p59 = scmp.eq.s32.totalorder %s23, 1
      %p60 = por %p58, %p59
      %p62 = scmp.ne.s32.totalorder %s45, %s61
      %p63 = scmp.eq.s32.totalorder %s23, 0
      %p64 = por %p62, %p63
      %s65 = ssub.s32 %s24, %s36
      %s66 = ssub.s32 %s25, %s32
      %s67 = sor.u32 %s65, %s66
      %p68 = scmp.eq.s32.totalorder %s67, 0
      %s70 = sadd.s32 %s69, 1
      %s71 = scalar_select %p68, %s69, %s70
      %p74 = pneg %p68
      %p75 = scmp.eq.s32.totalorder %s17, 1
      %p76 = por %p74, %p75
      %p77 = scmp.ne.s32.totalorder %s69, %s72
      %p78 = scmp.eq.s32.totalorder %s17, 0
      %p79 = por %p77, %p78
      %p80 = scmp.ne.s32.totalorder %s69, %s72
      %p81 = scmp.eq.s32.totalorder %s22, 1
      %p82 = por %p80, %p81
      %p83 = scmp.ne.s32.totalorder %s72, %s73
      %p84 = scmp.eq.s32.totalorder %s22, 0
      %p85 = por %p83, %p84
      %p86 = scmp.ne.s32.totalorder %s72, %s73
      %p87 = scmp.eq.s32.totalorder %s23, 1
      %p88 = por %p86, %p87
      %p90 = scmp.ne.s32.totalorder %s73, %s89
      %p91 = scmp.eq.s32.totalorder %s23, 0
      %p92 = por %p90, %p91
      %s93 = ssub.s32 %s24, %s36
      %s94 = ssub.s32 %s25, %s32
      %s95 = sor.u32 %s93, %s94
      %p96 = scmp.eq.s32.totalorder %s95, 0
      %s98 = sadd.s32 %s97, 1
      %s99 = scalar_select %p96, %s97, %s98
      %p102 = pneg %p96
      %p103 = scmp.eq.s32.totalorder %s17, 1
      %p104 = por %p102, %p103
      %p105 = scmp.ne.s32.totalorder %s97, %s100
      %p106 = scmp.eq.s32.totalorder %s17, 0
      %p107 = por %p105, %p106
      %p108 = scmp.ne.s32.totalorder %s97, %s100
      %p109 = scmp.eq.s32.totalorder %s22, 1
      %p110 = por %p108, %p109
      %p111 = scmp.ne.s32.totalorder %s100, %s101
      %p112 = scmp.eq.s32.totalorder %s22, 0
      %p113 = por %p111, %p112
      %p114 = scmp.ne.s32.totalorder %s100, %s101
      %p115 = scmp.eq.s32.totalorder %s23, 1
      %p116 = por %p114, %p115
      %p118 = scmp.ne.s32.totalorder %s101, %s117
      %p119 = scmp.eq.s32.totalorder %s23, 0
      %p120 = por %p118, %p119
      %p121 = scmp.le.s32.totalorder 1, %s17
      %p122 = scmp.lt.s32.totalorder %s17, 3
      %p123 = pnand %p121, %p122
      %p124 = pneg %p123
      // Predicated region
      $region9: #{tpu_custom_call.1} parent=5 // pred_check
        _
      $region10: #{tpu_custom_call.1} parent=5 // pred_check_branch
        %126 = sbr.rel (%p123) target = $region12
      $region11: #{tpu_custom_call.1} parent=5 // pred_region
        %s127 = ssub.s32 %s17, 1
      $region12: #{tpu_custom_call.1} parent=5 // pred_fallthru
        _
      %p128 = scmp.lt.s32.totalorder %s17, 2
      // Predicated region
      $region13: #{tpu_custom_call.1} parent=5 // pred_check
        %p129 = pneg %p128
      $region14: #{tpu_custom_call.1} parent=5 // pred_check_branch
        %131 = sbr.rel (%p129) target = $region16
      $region15: #{tpu_custom_call.1} parent=5 // pred_region
        // Predicated region
        $region17: #{tpu_custom_call.1} parent=15 // pred_check
          %p132 = pneg %p51
        $region18: #{tpu_custom_call.1} parent=15 // pred_check_branch
          %134 = sbr.rel (%p132) target = $region20
        $region19: #{tpu_custom_call.1} parent=15 // pred_region
          %s135 = sand.u32 %s41, 1
          %s136 = scalar_lea.sflag [#allocation3], %s135
          %s137 = sand.u32 %s41, 1
          %s138 = smul.addr %s137, 8
          %s139 = scalar_lea.vmem [#allocation2], %s138
          %s141 = ssub.s32 128, 128
          %142 = vsyncadd %s136, %s141
          %s143 = smul.addr %s24, 4
          %s144 = sadd.s32 %s25, %s143
          %s145 = smul.addr %s144, 32
          %s146 = scalar_lea.hbm %s0, %s145
          %s147 = sshll.u32 %s139, 4
          %s148 = int_to_ptr.vmem [resolvable:$true] %s147
          %153 = dma.hbm_to_vmem [thread:$0]  %s146, 128, %s148, %s136, 32, 32, 2
        $region20: #{tpu_custom_call.1} parent=15 // pred_fallthru
          _
        // Predicated region
        $region21: #{tpu_custom_call.1} parent=15 // pred_check
          %p154 = pneg %p79
        $region22: #{tpu_custom_call.1} parent=15 // pred_check_branch
          %156 = sbr.rel (%p154) target = $region24
        $region23: #{tpu_custom_call.1} parent=15 // pred_region
          %s157 = sand.u32 %s69, 1
          %s158 = scalar_lea.sflag [#allocation6], %s157
          %s159 = sand.u32 %s69, 1
          %s160 = smul.addr %s159, 2
          %s161 = scalar_lea.vmem [#allocation5], %s160
          %s163 = ssub.s32 32, 32
          %164 = vsyncadd %s158, %s163
          %s165 = sadd.s32 %s25, %s24
          %s166 = smul.addr %s165, 32
          %s167 = scalar_lea.hbm %s1, %s166
          %s169 = sshll.u32 %s161, 4
          %s170 = int_to_ptr.vmem [resolvable:$true] %s169
          %172 = dma.hbm_to_vmem [thread:$0]  %s167, 32, %s170, %s158
        $region24: #{tpu_custom_call.1} parent=15 // pred_fallthru
          _
      $region16: #{tpu_custom_call.1} parent=5 // pred_fallthru
        _
      %p173 = scmp.le.s32.totalorder 1, %s17
      %p174 = scmp.lt.s32.totalorder %s17, 3
      %p175 = pnand %p173, %p174
      %p176 = pneg %p175
      // Predicated region
      $region25: #{tpu_custom_call.1} parent=5 // pred_check
        _
      $region26: #{tpu_custom_call.1} parent=5 // pred_check_branch
        %178 = sbr.rel (%p175) target = $region28
      $region27: #{tpu_custom_call.1} parent=5 // pred_region
        %s179 = ssub.s32 %s17, 1
        %s180 = sand.u32 %s44, 1
        %s181 = scalar_lea.sflag [#allocation3], %s180
        %s182 = sand.u32 %s44, 1
        %s183 = smul.addr %s182, 8
        %s184 = scalar_lea.vmem [#allocation2], %s183
        // Predicated region
        $region29: #{tpu_custom_call.1} parent=27 // pred_check
          %p185 = pneg %p57
        $region30: #{tpu_custom_call.1} parent=27 // pred_check_branch
          %187 = sbr.rel (%p185) target = $region32
        $region31: #{tpu_custom_call.1} parent=27 // pred_region
          %188 = dma.done %s181, 128
        $region32: #{tpu_custom_call.1} parent=27 // pred_fallthru
          _
        %s189 = sand.u32 %s72, 1
        %s190 = scalar_lea.sflag [#allocation6], %s189
        %s191 = sand.u32 %s72, 1
        %s192 = smul.addr %s191, 2
        %s193 = scalar_lea.vmem [#allocation5], %s192
        // Predicated region
        $region33: #{tpu_custom_call.1} parent=27 // pred_check
          %p194 = pneg %p85
        $region34: #{tpu_custom_call.1} parent=27 // pred_check_branch
          %196 = sbr.rel (%p194) target = $region36
        $region35: #{tpu_custom_call.1} parent=27 // pred_region
          %197 = dma.done %s190, 32
        $region36: #{tpu_custom_call.1} parent=27 // pred_fallthru
          _
        %s198 = sand.u32 %s44, 1
        %s199 = scalar_lea.sflag [#allocation3], %s198
        %s200 = sand.u32 %s44, 1
        %s201 = smul.addr %s200, 8
        %s202 = scalar_lea.vmem [#allocation2], %s201
        %p203 = pneg %p57
        %p204 = pneg %p54
        %s205 = sand.u32 %s72, 1
        %s206 = scalar_lea.sflag [#allocation6], %s205
        %s207 = sand.u32 %s72, 1
        %s208 = smul.addr %s207, 2
        %s209 = scalar_lea.vmem [#allocation5], %s208
        %p210 = pneg %p85
        %p211 = pneg %p82
        %p212 = pneg %p113
        %p213 = pneg %p110
        %s214 = sand.u32 %s100, 1
        %s215 = scalar_lea.sflag [#allocation4], %s214
        %s216 = sand.u32 %s100, 1
        %s217 = scalar_lea.vmem [#allocation7], %s216
        %v218 = vld [vmem:[%s193] sm:$0x3]
        %v219 = vld [vmem:[%s184] sm:$0x3]
        %s220 = scalar_lea.vmem %s184, 2 [#allocation2]
        %v221 = vld [vmem:[%s220] sm:$0x3]
        %v222 = vmax.f32 %v219, %v221
        %s223 = scalar_lea.vmem %s184, 4 [#allocation2]
        %v224 = vld [vmem:[%s223] sm:$0x3]
        %v225 = vmax.f32 %v222, %v224
        %s226 = scalar_lea.vmem %s184, 6 [#allocation2]
        %v227 = vld [vmem:[%s226] sm:$0x3]
        %v228 = vmax.f32 %v225, %v227
        %v229 = vsub.f32 %v219, %v228
        %v230 = vmul.f32 %v229, 1.442695
        %v231 = vpow.pop %v230
        %v232 = vadd.f32 %v231, 0.0
        %vm233 = vcmp.eq.s32.totalorder %v218, 0
        %v234 = vsel %vm233, %v229, 0.0
        %v235 = vsub.f32 %v221, %v228
        %v236 = vmul.f32 %v235, 1.442695
        %v237 = vpow.pop %v236
        %v238 = vadd.f32 %v232, %v237
        %vm239 = vcmp.eq.s32.totalorder %v218, 1
        %v240 = vsel %vm239, %v235, %v234
        %v241 = vsub.f32 %v224, %v228
        %v242 = vmul.f32 %v241, 1.442695
        %v243 = vpow.pop %v242
        %v244 = vadd.f32 %v238, %v243
        %vm245 = vcmp.eq.s32.totalorder %v218, 2
        %v246 = vsel %vm245, %v241, %v240
        %v247 = vsub.f32 %v227, %v228
        %v248 = vmul.f32 %v247, 1.442695
        %v249 = vpow.pop %v248
        %v250 = vadd.f32 %v244, %v249
        %vm251 = vcmp.eq.s32.totalorder %v218, 3
        %v252 = vsel %vm251, %v247, %v246
        %v253 = vlog2.pop %v250
        %v254 = vmul.f32 %v253, 0.6931472
        %v255 = vsub.f32 %v252, %v254
        %v256 = vmul.f32 %v255, 1.442695
        %v257 = vpow.pop %v256
        %v258 = vsub.f32 1.0, %v257
        %v259 = vmul.f32 %v258, %v258
        %v260 = vmul.f32 %v259, %v255
        %v261 = vsub.f32 0.0, %v260
        %vm262 = vcmask 1041408
        %v263 = vsel %vm262, %v261, 0.0
        %v264 = vrot.slane %v263, 4
        %v265 = vadd.f32 %v263, %v264
        %v266 = vrot.slane %v265, 2
        %v267 = vadd.f32 %v265, %v266
        %v268 = vrot.slane %v267, 1
        %v269 = vadd.f32 %v267, %v268
        %270 = vst [vmem:[%s217] sm:$0x1] %v269
        %s271 = sand.u32 %s100, 1
        %s272 = scalar_lea.sflag [#allocation4], %s271
        %s273 = sand.u32 %s100, 1
        %s274 = scalar_lea.vmem [#allocation7], %s273
        // Predicated region
        $region37: #{tpu_custom_call.1} parent=27 // pred_check
          %p275 = pneg %p110
        $region38: #{tpu_custom_call.1} parent=27 // pred_check_branch
          %277 = sbr.rel (%p275) target = $region40
        $region39: #{tpu_custom_call.1} parent=27 // pred_region
          %s279 = ssub.s32 16, 16
          %280 = vsyncadd %s272, %s279
          %s281 = sadd.s32 %s27, %s26
          %s282 = smul.addr %s281, 16
          %s283 = scalar_lea.hbm %s2, %s282
          %s285 = sshll.u32 %s274, 4
          %s286 = int_to_ptr.vmem [resolvable:$true] %s285
          %288 = dma.vmem_to_hbm [thread:$0]  %s286, 16, %s283, %s272
        $region40: #{tpu_custom_call.1} parent=27 // pred_fallthru
          _
      $region28: #{tpu_custom_call.1} parent=5 // pred_fallthru
        _
      %p289 = scmp.le.s32.totalorder 2, %s17
      // Predicated region
      $region41: #{tpu_custom_call.1} parent=5 // pred_check
        %p290 = pneg %p289
      $region42: #{tpu_custom_call.1} parent=5 // pred_check_branch
        %292 = sbr.rel (%p290) target = $region44
      $region43: #{tpu_custom_call.1} parent=5 // pred_region
        %s293 = ssub.s32 %s17, 2
        // Predicated region
        $region45: #{tpu_custom_call.1} parent=43 // pred_check
          %p294 = pneg %p116
        $region46: #{tpu_custom_call.1} parent=43 // pred_check_branch
          %296 = sbr.rel (%p294) target = $region48
        $region47: #{tpu_custom_call.1} parent=43 // pred_region
          %s297 = sand.u32 %s101, 1
          %s298 = scalar_lea.sflag [#allocation4], %s297
          %s299 = sand.u32 %s101, 1
          %s300 = scalar_lea.vmem [#allocation7], %s299
          %301 = dma.done %s298, 16
        $region48: #{tpu_custom_call.1} parent=43 // pred_fallthru
          _
      $region44: #{tpu_custom_call.1} parent=5 // pred_fallthru
        _
    $region6: #{tpu_custom_call.1} parent=1 // loop_footer
      %s21 = sadd.s32 1, %s17
    $region7: #{tpu_custom_call.1} parent=1 // loop_footer_branch
      %16 = sbr.rel target = $region3
    $region8: #{tpu_custom_call.1} parent=1 // loop_exit
      _
    %302 = vsyncpa [#allocation3], 1
    %s303 = scalar_lea.sflag [#allocation3], 1
    %304 = vsyncpa %s303, 1
    %305 = vsyncpa [#allocation6], 1
    %s306 = scalar_lea.sflag [#allocation6], 1
    %307 = vsyncpa %s306, 1
    %308 = vsyncpa [#allocation4], 1
    %s309 = scalar_lea.sflag [#allocation4], 1
    %310 = vsyncpa %s309, 1

</llo_original>
